<compile_context>
chip_gen: v5e
topology: v5e:2x2
jax: 0.10.0
libtpu: 0.0.40
codegen_flags: <defaults>
</compile_context>

<pallas_src>
import functools

import jax
import jax.numpy as jnp
from jax.experimental import pallas as pl
from jax.experimental.pallas import tpu as pltpu


def _round_up(a: int, b: int) -> int:
    return (a + b - 1) // b * b


def _make_mlp_kernel(d_real: int):
    def mlp_kernel(x_ref, w1_ref, b1_ref, w2_ref, b2_ref, o_ref):
        x = x_ref[...]          # (TN, Dp)
        w1 = w1_ref[...]        # (Dp, Hp)
        b1 = b1_ref[...]        # (1, Hp)
        tn = x.shape[0]
        hp = w1.shape[1]

        # Hidden layer: relu(X @ W1 + b1)  (clamp(0) in the PyTorch code)
        if d_real <= 8:
            # Tiny-K contraction: two VPU broadcast FMAs per tile are cheaper than a
            # K=2 MXU push/pop, and keep the MXU free for the second (K=128) matmul.
            h = jnp.broadcast_to(b1, (tn, hp))
            for k in range(d_real):
                h = h + x[:, k:k + 1] * w1[k:k + 1, :]
        else:
            h = jnp.dot(x, w1, preferred_element_type=jnp.float32) + b1
        h = jnp.maximum(h, 0.0)

        # Output layer: softmax(h @ W2 + b2) == exp(Z) / sum(exp(Z), dim=1)
        # (unstabilized, matching the reference module's softmax exactly).
        # Padded logit columns carry a -1e30 bias -> exp underflows to exactly 0,
        # so the full-width lane-dense sum equals the real-column denominator.
        z = jnp.dot(h, w2_ref[...], preferred_element_type=jnp.float32) + b2_ref[...]
        e = jnp.exp(z)
        denom = jnp.sum(e, axis=1, keepdims=True)
        o_ref[...] = e * pl.reciprocal(denom, approx=False)

    return mlp_kernel


@functools.partial(jax.jit, static_argnames=("tile_n",))
def mlp_forward(x, w1, b1, w2, b2, *, tile_n: int = 1024):
    """Fused forward pass of neural_network([D, H, O]) in one Pallas TPU kernel."""
    x = jnp.asarray(x, jnp.float32)
    w1 = jnp.asarray(w1, jnp.float32)
    b1 = jnp.asarray(b1, jnp.float32)
    w2 = jnp.asarray(w2, jnp.float32)
    b2 = jnp.asarray(b2, jnp.float32)

    n, d = x.shape
    n_hidden = w1.shape[1]
    n_out = w2.shape[1]

    # Lane/sublane-aligned padded dims (done once per call, in the wrapper).
    dp = _round_up(d, 8)
    hp = _round_up(n_hidden, 128)
    op = _round_up(n_out, 128)

    # Batch tile: generation-safe (fits v7x's smaller VMEM), grid gives pipelining.
    tn = min(tile_n, _round_up(n, 8))
    n_pad = _round_up(n, tn)
    grid = (n_pad // tn,)

    xp = jnp.pad(x, ((0, n_pad - n), (0, dp - d)))
    w1p = jnp.pad(w1, ((0, dp - d), (0, hp - n_hidden)))
    b1p = jnp.pad(b1, (0, hp - n_hidden)).reshape(1, hp)
    w2p = jnp.pad(w2, ((0, hp - n_hidden), (0, op - n_out)))
    # Huge negative bias on padded output columns -> exp() == 0 in the kernel.
    b2p = jnp.pad(b2, (0, op - n_out), constant_values=-1e30).reshape(1, op)

    flops = 2 * n * (d * n_hidden + n_hidden * n_out)
    bytes_accessed = 4 * (xp.size + w1p.size + b1p.size + w2p.size + b2p.size + n_pad * op)

    out = pl.pallas_call(
        _make_mlp_kernel(d),
        out_shape=jax.ShapeDtypeStruct((n_pad, op), jnp.float32),
        grid=grid,
        in_specs=[
            pl.BlockSpec((tn, dp), lambda i: (i, 0)),   # X tile, pipelined over batch
            pl.BlockSpec((dp, hp), lambda i: (0, 0)),   # W1 resident across steps
            pl.BlockSpec((1, hp), lambda i: (0, 0)),    # b1 resident
            pl.BlockSpec((hp, op), lambda i: (0, 0)),   # W2 resident
            pl.BlockSpec((1, op), lambda i: (0, 0)),    # b2 resident
        ],
        out_specs=pl.BlockSpec((tn, op), lambda i: (i, 0)),  # lane-dense (op = k*128) store
        compiler_params=pltpu.CompilerParams(
            dimension_semantics=("parallel",),
        ),
        cost_estimate=pl.CostEstimate(
            flops=flops,
            transcendentals=n * n_out,
            bytes_accessed=bytes_accessed,
        ),
    )(xp, w1p, b1p, w2p, b2p)

    # Slice the real batch rows / output classes back out of the padded slab.
    return out[:n, :n_out]


def reference_forward(x, w1, b1, w2, b2):
    h = jnp.maximum(x @ w1 + b1, 0.0)
    z = h @ w2 + b2
    e = jnp.exp(z)
    return e / jnp.sum(e, axis=1, keepdims=True)


if __name__ == "__main__":
    # Deterministic params mirroring the module's __init__:
    #   layers=[2, 100, 2], scale=0.1, weights ~ scale*randn(m, n), biases ~ scale*randn(n)
    layers = [2, 100, 2]
    scale = 0.1
    key = jax.random.PRNGKey(0)
    k_w1, k_b1, k_w2, k_b2, k_x = jax.random.split(key, 5)

    w1 = scale * jax.random.normal(k_w1, (layers[0], layers[1]), dtype=jnp.float32)
    b1 = scale * jax.random.normal(k_b1, (layers[1],), dtype=jnp.float32)
    w2 = scale * jax.random.normal(k_w2, (layers[1], layers[2]), dtype=jnp.float32)
    b2 = scale * jax.random.normal(k_b2, (layers[2],), dtype=jnp.float32)

    # Small batch of 2-D feature vectors, as the module's forward implies.
    x = jax.random.normal(k_x, (8, layers[0]), dtype=jnp.float32)

    out = mlp_forward(x, w1, b1, w2, b2)
    out = jax.block_until_ready(out)

    ref = reference_forward(x, w1, b1, w2, b2)
    assert out.shape == (8, layers[-1])
    assert jnp.allclose(out, ref, atol=1e-5, rtol=1e-5)
    # Softmax rows sum to 1
    assert jnp.allclose(jnp.sum(out, axis=1), jnp.ones(8), atol=1e-5)

    # TODO(synk): training-mode dropout mask (self.train=True path) is not implemented;
    # this kernel covers the inference forward() semantics only.
    print("KERNEL_OK")
</pallas_src>

<mosaic_0001>
module attributes {stable_mosaic.version = 11 : i64} {
  func.func @mlp_kernel(%arg0: i32, %arg1: memref<8x8xf32, #tpu.memory_space<vmem>>, %arg2: memref<8x128xf32, #tpu.memory_space<vmem>>, %arg3: memref<1x128xf32, #tpu.memory_space<vmem>>, %arg4: memref<128x128xf32, #tpu.memory_space<vmem>>, %arg5: memref<1x128xf32, #tpu.memory_space<vmem>>, %arg6: memref<8x128xf32, #tpu.memory_space<vmem>>) attributes {dimension_semantics = [#tpu.dimension_semantics<parallel>], iteration_bounds = array<i64: 1>, scalar_prefetch = 0 : i64, scratch_operands = 0 : i64, tpu.core_type = #tpu.core_type<tc>, window_params = [{transform_indices = @transform_0, window_bounds = array<i64: 8, 8>}, {pipeline_mode = #tpu.pipeline_mode<synchronous>, transform_indices = @transform_1, window_bounds = array<i64: 8, 128>}, {pipeline_mode = #tpu.pipeline_mode<synchronous>, transform_indices = @transform_2, window_bounds = array<i64: 1, 128>}, {pipeline_mode = #tpu.pipeline_mode<synchronous>, transform_indices = @transform_3, window_bounds = array<i64: 128, 128>}, {pipeline_mode = #tpu.pipeline_mode<synchronous>, transform_indices = @transform_4, window_bounds = array<i64: 1, 128>}, {transform_indices = @transform_5, window_bounds = array<i64: 8, 128>}]} {
    %c0 = arith.constant 0 : index
    %c0_0 = arith.constant 0 : index
    %0 = vector.load %arg1[%c0, %c0_0] : memref<8x8xf32, #tpu.memory_space<vmem>>, vector<8x8xf32>
    %c0_1 = arith.constant 0 : index
    %c0_2 = arith.constant 0 : index
    %1 = vector.load %arg2[%c0_1, %c0_2] : memref<8x128xf32, #tpu.memory_space<vmem>>, vector<8x128xf32>
    %c0_3 = arith.constant 0 : index
    %c0_4 = arith.constant 0 : index
    %2 = vector.load %arg3[%c0_3, %c0_4] : memref<1x128xf32, #tpu.memory_space<vmem>>, vector<1x128xf32>
    %3 = vector.shape_cast %2 : vector<1x128xf32> to vector<1x128xf32>
    %4 = vector.broadcast %3 : vector<1x128xf32> to vector<8x128xf32>
    %5 = vector.extract_strided_slice %0 {offsets = [0, 0], sizes = [8, 1], strides = [1, 1]} : vector<8x8xf32> to vector<8x1xf32>
    %6 = vector.extract_strided_slice %1 {offsets = [0, 0], sizes = [1, 128], strides = [1, 1]} : vector<8x128xf32> to vector<1x128xf32>
    %7 = vector.broadcast %5 : vector<8x1xf32> to vector<8x128xf32>
    %8 = vector.broadcast %6 : vector<1x128xf32> to vector<8x128xf32>
    %9 = arith.mulf %7, %8 : vector<8x128xf32>
    %10 = arith.addf %4, %9 : vector<8x128xf32>
    %11 = vector.extract_strided_slice %0 {offsets = [0, 1], sizes = [8, 1], strides = [1, 1]} : vector<8x8xf32> to vector<8x1xf32>
    %12 = vector.extract_strided_slice %1 {offsets = [1, 0], sizes = [1, 128], strides = [1, 1]} : vector<8x128xf32> to vector<1x128xf32>
    %13 = vector.broadcast %11 : vector<8x1xf32> to vector<8x128xf32>
    %14 = vector.broadcast %12 : vector<1x128xf32> to vector<8x128xf32>
    %15 = arith.mulf %13, %14 : vector<8x128xf32>
    %16 = arith.addf %10, %15 : vector<8x128xf32>
    %cst = arith.constant 0.000000e+00 : f32
    %17 = vector.broadcast %cst : f32 to vector<8x128xf32>
    %18 = arith.maximumf %16, %17 : vector<8x128xf32>
    %c0_5 = arith.constant 0 : index
    %c0_6 = arith.constant 0 : index
    %19 = vector.load %arg4[%c0_5, %c0_6] : memref<128x128xf32, #tpu.memory_space<vmem>>, vector<128x128xf32>
    %cst_7 = arith.constant dense<0.000000e+00> : vector<8x128xf32>
    %20 = tpu.matmul %18, %19, %cst_7 {dimension_numbers = #tpu.dot_dimension_numbers<[1], [0], [0], [1], [0, 0, 1, 1], [], []>} : vector<8x128xf32>, vector<128x128xf32>, vector<8x128xf32> -> vector<8x128xf32>
    %c0_8 = arith.constant 0 : index
    %c0_9 = arith.constant 0 : index
    %21 = vector.load %arg5[%c0_8, %c0_9] : memref<1x128xf32, #tpu.memory_space<vmem>>, vector<1x128xf32>
    %22 = vector.broadcast %21 : vector<1x128xf32> to vector<8x128xf32>
    %23 = arith.addf %20, %22 : vector<8x128xf32>
    %24 = math.exp %23 : vector<8x128xf32>
    %cst_10 = arith.constant dense<0.000000e+00> : vector<8xf32>
    %25 = vector.multi_reduction <add>, %24, %cst_10 [1] : vector<8x128xf32> to vector<8xf32>
    %26 = vector.shape_cast %25 : vector<8xf32> to vector<8x1xf32>
    %27 = tpu.reciprocal %26 : vector<8x1xf32> -> vector<8x1xf32>
    %28 = vector.broadcast %27 : vector<8x1xf32> to vector<8x128xf32>
    %29 = arith.mulf %24, %28 : vector<8x128xf32>
    %c0_11 = arith.constant 0 : index
    %c0_12 = arith.constant 0 : index
    %30 = vector.load %arg6[%c0_11, %c0_12] : memref<8x128xf32, #tpu.memory_space<vmem>>, vector<8x128xf32>
    tpu.vector_store %arg6[%c0_11, %c0_12], %29 {strides = array<i32>} : memref<8x128xf32, #tpu.memory_space<vmem>>, vector<8x128xf32>,
    return
  }
  func.func @transform_0(%arg0: i32) -> (i32, i32) {
    %c0_i32 = arith.constant 0 : i32
    %c0_i32_0 = arith.constant 0 : i32
    return %arg0, %c0_i32 : i32, i32
  }
  func.func @transform_1(%arg0: i32) -> (i32, i32) {
    %c0_i32 = arith.constant 0 : i32
    %c0_i32_0 = arith.constant 0 : i32
    %c0_i32_1 = arith.constant 0 : i32
    return %c0_i32, %c0_i32_0 : i32, i32
  }
  func.func @transform_2(%arg0: i32) -> (i32, i32) {
    %c0_i32 = arith.constant 0 : i32
    %c0_i32_0 = arith.constant 0 : i32
    %c0_i32_1 = arith.constant 0 : i32
    return %c0_i32, %c0_i32_0 : i32, i32
  }
  func.func @transform_3(%arg0: i32) -> (i32, i32) {
    %c0_i32 = arith.constant 0 : i32
    %c0_i32_0 = arith.constant 0 : i32
    %c0_i32_1 = arith.constant 0 : i32
    return %c0_i32, %c0_i32_0 : i32, i32
  }
  func.func @transform_4(%arg0: i32) -> (i32, i32) {
    %c0_i32 = arith.constant 0 : i32
    %c0_i32_0 = arith.constant 0 : i32
    %c0_i32_1 = arith.constant 0 : i32
    return %c0_i32, %c0_i32_0 : i32, i32
  }
  func.func @transform_5(%arg0: i32) -> (i32, i32) {
    %c0_i32 = arith.constant 0 : i32
    %c0_i32_0 = arith.constant 0 : i32
    return %arg0, %c0_i32 : i32, i32
  }
}

</mosaic_0001>

<llo_original>
// kernel: mlp_forward.1
$region0: #{mlp_forward.1}
  #allocation0 [shape = 'u32[]', space=smem, size = 0x4, offset = 0x4, fixed_abs, tag = 'smem constant byte address 0x4 - core index']
  #allocation1 [shape = 'u32[72,128]{1,0:T(1,128)}', space=vmem, size = 0x9000, scoped, tag = 'internal scratch']
  %s0 = inlined_call_operand.vmem [shape: f32[8,8], index: 0, kind: input, shape index: {}]
  %s1 = inlined_call_operand.vmem [shape: f32[8,128], index: 1, kind: input, shape index: {}]
  %s2 = inlined_call_operand.vmem [shape: f32[1,128], index: 2, kind: input, shape index: {}]
  %s3 = inlined_call_operand.vmem [shape: f32[128,128], index: 3, kind: input, shape index: {}]
  %s4 = inlined_call_operand.vmem [shape: f32[1,128], index: 4, kind: input, shape index: {}]
  %s5 = inlined_call_operand.vmem [shape: f32[8,128], index: 5, kind: output, shape index: {}]
  %s6 = sld [smem:[#allocation0]]
  $region30: #{mlp_forward.1} parent=0
    _
  %s8 = ssub.s32 1, %s6
  %s9 = scalar_select 0, %s8, %s6
  // Predicated region
  $region2: #{mlp_forward.1} parent=0 // pred_check
    _
  $region3: #{mlp_forward.1} parent=0 // pred_check_branch
    %11 = sbr.rel (0) target = $region5
  $region4: #{mlp_forward.1} parent=0 // pred_region
    _
  $region5: #{mlp_forward.1} parent=0 // pred_fallthru
    _
  // Predicated region
  $region6: #{mlp_forward.1} parent=0 // pred_check
    _
  $region7: #{mlp_forward.1} parent=0 // pred_check_branch
    %13 = sbr.rel (0) target = $region9
  $region8: #{mlp_forward.1} parent=0 // pred_region
    _
  $region9: #{mlp_forward.1} parent=0 // pred_fallthru
    _
  // Predicated region
  $region10: #{mlp_forward.1} parent=0 // pred_check
    _
  $region11: #{mlp_forward.1} parent=0 // pred_check_branch
    %15 = sbr.rel (0) target = $region13
  $region12: #{mlp_forward.1} parent=0 // pred_region
    _
  $region13: #{mlp_forward.1} parent=0 // pred_fallthru
    _
  // Predicated region
  $region14: #{mlp_forward.1} parent=0 // pred_check
    _
  $region15: #{mlp_forward.1} parent=0 // pred_check_branch
    %17 = sbr.rel (0) target = $region17
  $region16: #{mlp_forward.1} parent=0 // pred_region
    _
  $region17: #{mlp_forward.1} parent=0 // pred_fallthru
    _
  // Predicated region
  $region18: #{mlp_forward.1} parent=0 // pred_check
    _
  $region19: #{mlp_forward.1} parent=0 // pred_check_branch
    %19 = sbr.rel (0) target = $region21
  $region20: #{mlp_forward.1} parent=0 // pred_region
    _
  $region21: #{mlp_forward.1} parent=0 // pred_fallthru
    _
  %v20 = vld [vmem:[%s0] sm:$0xff]
  %v21 = vld [vmem:[%s1] sm:$0xff]
  %v22 = vld [vmem:[%s2] sm:$0x1]
  %v24 = vperm.slane %v22, 0
  %27 = vset.pattern.permute.xlu0 0
  %28 = vperm.xlu0 %27, %v20
  %v29 = vpop.permute.xlu0 %28
  %v31 = vperm.slane %v21, 0
  %v32 = vmul.f32 %v29, %v31
  %v33 = vadd.f32 %v24, %v32
  %34 = vset.pattern.permute.xlu0 1
  %35 = vperm.xlu0 %34, %v20
  %v36 = vpop.permute.xlu0 %35
  %v38 = vperm.slane %v21, 1
  %v39 = vmul.f32 %v36, %v38
  %v40 = vadd.f32 %v33, %v39
  %v41 = vmax.f32 %v40, 0.0
  %v42 = vld [vmem:[%s3] sm:$0xff]
  %v43 = vld [vmem:[%s3 + $0x8] sm:$0xff]
  %v44 = vld [vmem:[%s3 + $0x10] sm:$0xff]
  %v45 = vld [vmem:[%s3 + $0x18] sm:$0xff]
  %v46 = vld [vmem:[%s3 + $0x20] sm:$0xff]
  %v47 = vld [vmem:[%s3 + $0x28] sm:$0xff]
  %v48 = vld [vmem:[%s3 + $0x30] sm:$0xff]
  %v49 = vld [vmem:[%s3 + $0x38] sm:$0xff]
  %v50 = vld [vmem:[%s3 + $0x40] sm:$0xff]
  %v51 = vld [vmem:[%s3 + $0x48] sm:$0xff]
  %v52 = vld [vmem:[%s3 + $0x50] sm:$0xff]
  %v53 = vld [vmem:[%s3 + $0x58] sm:$0xff]
  %v54 = vld [vmem:[%s3 + $0x60] sm:$0xff]
  %v55 = vld [vmem:[%s3 + $0x68] sm:$0xff]
  %v56 = vld [vmem:[%s3 + $0x70] sm:$0xff]
  %v57 = vld [vmem:[%s3 + $0x78] sm:$0xff]
  %v58 = vld [vmem:[%s4] sm:$0x1]
  %v60 = vperm.slane %v58, 0
  %62 = vmatpush.msra.mxu0 %v57
  %63 = vmatpush.msra.mxu0 %v56
  %64 = vmatpush.msra.mxu0 %v55
  %65 = vmatpush.msra.mxu0 %v54
  %66 = vmatpush.msra.mxu0 %v53
  %67 = vmatpush.msra.mxu0 %v52
  %68 = vmatpush.msra.mxu0 %v51
  %69 = vmatpush.msra.mxu0 %v50
  %70 = vmatpush.msra.mxu0 %v49
  %71 = vmatpush.msra.mxu0 %v48
  %72 = vmatpush.msra.mxu0 %v47
  %73 = vmatpush.msra.mxu0 %v46
  %74 = vmatpush.msra.mxu0 %v45
  %75 = vmatpush.msra.mxu0 %v44
  %76 = vmatpush.msra.mxu0 %v43
  %77 = vmatpush.msra.mxu0 %v42
  %78 = vmatmul.f32.gmra.mxu0 %v41
  %v79 = vpop.f32.mrf.mxu0
  %v80 = vadd.f32 %v60, %v79
  %81 = vdwg.mxu0
  %v82 = vmul.f32 %v80, 1.442695
  %v83 = vpow.pop %v82
  %84 = vadd.xlane.f32.xlu0 %v83
  %v85 = vpop.xlane.xlu0 %84
  %v86 = vrcp.pop %v85
  %v87 = vmul.f32 %v85, %v86
  %v88 = vsub.f32 1.0, %v87
  %v89 = vmul.f32 %v86, %v88
  %v90 = vadd.f32 %v86, %v89
  %vm91 = vweird.f32 %v85
  %vm92 = vweird.f32 %v86
  %vm93 = vmor %vm91, %vm92
  %v94 = vsel %vm93, %v86, %v90
  %v95 = vand.u32 2147483647, %v85
  %vm96 = vcmp.eq.f32.partialorder %v95, 8.507059e+37
  %v97 = vand.u32 %v85, 2147483648
  %v98 = vor.u32 1.1754944e-38, %v97
  %v99 = vsel %vm96, %v98, %v94
  %v100 = vmul.f32 %v83, %v99
  %101 = vst [vmem:[%s5] sm:$0xff] %v100
  // Predicated region
  $region22: #{mlp_forward.1} parent=0 // pred_check
    _
  $region23: #{mlp_forward.1} parent=0 // pred_check_branch
    %103 = sbr.rel (0) target = $region25
  $region24: #{mlp_forward.1} parent=0 // pred_region
    _
  $region25: #{mlp_forward.1} parent=0 // pred_fallthru
    _
  // Predicated region
  $region26: #{mlp_forward.1} parent=0 // pred_check
    _
  $region27: #{mlp_forward.1} parent=0 // pred_check_branch
    %105 = sbr.rel (0) target = $region29
  $region28: #{mlp_forward.1} parent=0 // pred_region
    _
  $region29: #{mlp_forward.1} parent=0 // pred_fallthru
    _

</llo_original>
